<compile_context>
chip_gen: v7x
topology: tpu7x:2x2x1
jax: 0.10.0
libtpu: 0.0.40
codegen_flags: <defaults>
</compile_context>

<pallas_src>
import jax
import jax.numpy as jnp
from jax.experimental import pallas as pl
from jax.experimental.pallas import tpu as pltpu

LANES = 128  # lane width of the weight slab / kernel intermediates / output


# --------------------------------------------------------------------------
# Kernel
# --------------------------------------------------------------------------
def _ethical_safety_kernel(s_ref, a_ref, c_ref, w_ref, b_ref, out_ref):
    """s/a/c_ref: (TB, H) activations; w_ref: (3H + 3*128, 128) bf16 weight slab;
    b_ref: (8, 128) f32 bias rows; out_ref: (TB, 128) bf16,
    col 0 = safety score, col 1 = ethics score."""
    f32 = jnp.float32
    bf16 = jnp.bfloat16
    H = s_ref.shape[1]
    L = out_ref.shape[1]                       # 128
    r2, r3, r4 = 3 * H, 3 * H + L, 3 * H + 2 * L   # static slab row offsets

    b = b_ref[...]                             # (8, 128) f32 bias rows

    # Stage 1 (block-diag, three accumulating dots): cols 0:H = encoder hidden,
    # cols H:2H = ethics hidden (eth_w1 rows split over action / context).
    y = (jnp.dot(s_ref[...].astype(bf16), w_ref[0:H, :],
                 preferred_element_type=f32)
         + jnp.dot(a_ref[...].astype(bf16), w_ref[H:2 * H, :],
                   preferred_element_type=f32)
         + jnp.dot(c_ref[...].astype(bf16), w_ref[2 * H:3 * H, :],
                   preferred_element_type=f32)
         + b[0:1, :])
    y = jnp.maximum(y, 0.0)

    # Stage 2 (block-diag, no activation): cols 0:H = encoded state,
    # col H = ethics logit (e1 @ eth_w2 + eth_b2).
    y = jnp.dot(y.astype(bf16), w_ref[r2:r2 + L, :],
                preferred_element_type=f32) + b[1:2, :]

    # Stage 3: cols 0:H/2 = safety hidden (relu); cols H/2, H/2+1 carry
    # relu(+ethics_logit), relu(-ethics_logit) for the identity pass-through.
    y = jnp.dot(y.astype(bf16), w_ref[r3:r3 + L, :],
                preferred_element_type=f32) + b[2:3, :]
    y = jnp.maximum(y, 0.0)

    # Stage 4: col 0 = safety logit, col 1 = reconstructed ethics logit.
    y = jnp.dot(y.astype(bf16), w_ref[r4:r4 + L, :],
                preferred_element_type=f32) + b[3:4, :]

    # Single unmasked lane-dense bf16 store; cols >= 2 are sigmoid(0) (unused).
    out_ref[...] = jax.nn.sigmoid(y).astype(out_ref.dtype)


# --------------------------------------------------------------------------
# Host-side weight packing
# --------------------------------------------------------------------------
def _pack_weights(p, H):
    """Pack Linear weights into one (3H + 3*128, 128) bf16 slab + (8,128) f32 bias."""
    Hh = H // 2
    L = LANES
    # TODO(synk): layout assumes 2*H <= 128; larger hidden_dim needs a wider slab.
    assert 2 * H <= L and Hh + 2 <= L and H % 8 == 0, "layout assumes small H"
    K1 = 3 * H
    slab = jnp.zeros((K1 + 3 * L, L), jnp.float32)

    # Stage 1: state -> cols 0:H (enc hidden); action/context -> cols H:2H (eth hidden).
    slab = slab.at[0:H, 0:H].set(p["enc_w1"])
    slab = slab.at[H:2 * H, H:2 * H].set(p["eth_w1"][0:H])        # action rows
    slab = slab.at[2 * H:3 * H, H:2 * H].set(p["eth_w1"][H:2 * H])  # context rows

    # Stage 2: y1 (TB,128) -> cols 0:H encoded, col H = ethics logit.
    r2 = K1
    slab = slab.at[r2 + 0:r2 + H, 0:H].set(p["enc_w2"])
    slab = slab.at[r2 + H:r2 + 2 * H, H:H + 1].set(p["eth_w2"])

    # Stage 3: y2 -> cols 0:Hh safety hidden; cols Hh, Hh+1 = +/- ethics logit
    # pass-through (relu(x) - relu(-x) == x, recombined in stage 4).
    r3 = K1 + L
    slab = slab.at[r3 + 0:r3 + H, 0:Hh].set(p["safe_w1"])
    slab = slab.at[r3 + H, Hh].set(1.0)
    slab = slab.at[r3 + H, Hh + 1].set(-1.0)

    # Stage 4: y3 -> col 0 safety logit, col 1 ethics logit.
    r4 = K1 + 2 * L
    slab = slab.at[r4 + 0:r4 + Hh, 0:1].set(p["safe_w2"])
    slab = slab.at[r4 + Hh, 1].set(1.0)
    slab = slab.at[r4 + Hh + 1, 1].set(-1.0)

    # Bias rows (one row per stage), lane-padded with zeros, kept in f32.
    bias = jnp.zeros((8, L), jnp.float32)
    bias = bias.at[0, 0:H].set(p["enc_b1"])
    bias = bias.at[0, H:2 * H].set(p["eth_b1"])
    bias = bias.at[1, 0:H].set(p["enc_b2"])
    bias = bias.at[1, H:H + 1].set(p["eth_b2"])
    bias = bias.at[2, 0:Hh].set(p["safe_b1"])
    bias = bias.at[3, 0:1].set(p["safe_b2"])

    return slab.astype(jnp.bfloat16), bias


def make_params(hidden_dim: int, seed: int = 42):
    """Deterministic synthetic parameters matching the PyTorch module shapes."""
    H, Hh = hidden_dim, hidden_dim // 2
    ks = jax.random.split(jax.random.PRNGKey(seed), 6)

    def lin(k, n_in, n_out):
        kw, kb = jax.random.split(k)
        scale = 1.0 / jnp.sqrt(jnp.float32(n_in))
        w = jax.random.uniform(kw, (n_in, n_out), jnp.float32, -scale, scale)
        b = jax.random.uniform(kb, (n_out,), jnp.float32, -scale, scale)
        return w, b

    enc_w1, enc_b1 = lin(ks[0], H, H)
    enc_w2, enc_b2 = lin(ks[1], H, H)
    safe_w1, safe_b1 = lin(ks[2], H, Hh)
    safe_w2, safe_b2 = lin(ks[3], Hh, 1)
    eth_w1, eth_b1 = lin(ks[4], 2 * H, H)   # over concat([action, context])
    eth_w2, eth_b2 = lin(ks[5], H, 1)

    raw = dict(
        enc_w1=enc_w1, enc_b1=enc_b1, enc_w2=enc_w2, enc_b2=enc_b2,
        safe_w1=safe_w1, safe_b1=safe_b1, safe_w2=safe_w2, safe_b2=safe_b2,
        eth_w1=eth_w1, eth_b1=eth_b1, eth_w2=eth_w2, eth_b2=eth_b2,
    )
    slab, bias = _pack_weights(raw, H)
    return raw, slab, bias


# --------------------------------------------------------------------------
# Batch tiling (static, trace-time)
# --------------------------------------------------------------------------
def _batch_tiling(B: int):
    """Returns (padded_batch, batch_tile). TB capped at 256 so large batches
    pipeline and split across v7x's two TensorCores; small batches use one tile."""
    TB_MAX = 256
    if B <= TB_MAX:
        Bp = ((B + 7) // 8) * 8      # sublane-align; block == full array dim
        return Bp, Bp
    Bp = ((B + TB_MAX - 1) // TB_MAX) * TB_MAX
    return Bp, TB_MAX


# --------------------------------------------------------------------------
# Fused forward (single jit: kernel + threshold glue)
# --------------------------------------------------------------------------
@jax.jit
def ethical_safety_forward(weight_slab, bias, state, action, context):
    B, H = state.shape
    Bp, TB = _batch_tiling(B)
    if Bp != B:
        pad = ((0, Bp - B), (0, 0))
        state = jnp.pad(state, pad)
        action = jnp.pad(action, pad)
        context = jnp.pad(context, pad)

    x_spec = pl.BlockSpec((TB, H), lambda i: (i, 0))
    w_spec = pl.BlockSpec(weight_slab.shape, lambda i: (0, 0))   # VMEM-resident
    b_spec = pl.BlockSpec(bias.shape, lambda i: (0, 0))          # VMEM-resident
    o_spec = pl.BlockSpec((TB, LANES), lambda i: (i, 0))

    scores = pl.pallas_call(
        _ethical_safety_kernel,
        out_shape=jax.ShapeDtypeStruct((Bp, LANES), jnp.bfloat16),
        grid=(Bp // TB,),
        in_specs=[x_spec, x_spec, x_spec, w_spec, b_spec],
        out_specs=o_spec,
        compiler_params=pltpu.CompilerParams(
            dimension_semantics=("parallel",)),
    )(state, action, context, weight_slab, bias)

    scores = scores[:B]
    safety_score = scores[:, 0:1].astype(jnp.float32)
    ethics_score = scores[:, 1:2].astype(jnp.float32)
    is_safe = safety_score > 0.5
    is_ethical = ethics_score > 0.7
    return {
        "is_safe": is_safe,
        "is_ethical": is_ethical,
        "safety_metrics": {"safety_score": safety_score, "safety_threshold": 0.5},
        "ethics_metrics": {"ethics_score": ethics_score, "ethics_threshold": 0.7},
        "constraints_satisfied": jnp.all(is_safe & is_ethical),
    }


# --------------------------------------------------------------------------
# Pure-JAX reference (for correctness checking)
# --------------------------------------------------------------------------
def _reference_forward(p, state, action, context):
    h = jnp.maximum(state @ p["enc_w1"] + p["enc_b1"], 0.0)
    enc = h @ p["enc_w2"] + p["enc_b2"]
    s1 = jnp.maximum(enc @ p["safe_w1"] + p["safe_b1"], 0.0)
    safety = jax.nn.sigmoid(s1 @ p["safe_w2"] + p["safe_b2"])
    comb = jnp.concatenate([action, context], axis=-1)
    e1 = jnp.maximum(comb @ p["eth_w1"] + p["eth_b1"], 0.0)
    ethics = jax.nn.sigmoid(e1 @ p["eth_w2"] + p["eth_b2"])
    return safety, ethics


if __name__ == "__main__":
    B, H = 8, 32
    key = jax.random.PRNGKey(0)
    ks, ka, kc = jax.random.split(key, 3)
    state = jax.random.normal(ks, (B, H), jnp.float32)
    action = jax.random.normal(ka, (B, H), jnp.float32)
    context = jax.random.normal(kc, (B, H), jnp.float32)

    raw_params, weight_slab, bias = make_params(H)

    out = ethical_safety_forward(weight_slab, bias, state, action, context)
    jax.block_until_ready(out)

    ref_safety, ref_ethics = _reference_forward(raw_params, state, action, context)
    # bf16 matmul operands + bf16 output -> relaxed tolerance.
    assert jnp.allclose(out["safety_metrics"]["safety_score"], ref_safety,
                        atol=2e-2, rtol=2e-2)
    assert jnp.allclose(out["ethics_metrics"]["ethics_score"], ref_ethics,
                        atol=2e-2, rtol=2e-2)
    assert out["is_safe"].shape == (B, 1) and out["is_ethical"].shape == (B, 1)
    assert out["constraints_satisfied"].shape == ()

    print("KERNEL_OK")
</pallas_src>

<mosaic_0001>
module attributes {stable_mosaic.version = 11 : i64} {
  func.func @_ethical_safety_kernel(%arg0: i32, %arg1: memref<8x32xf32, #tpu.memory_space<vmem>>, %arg2: memref<8x32xf32, #tpu.memory_space<vmem>>, %arg3: memref<8x32xf32, #tpu.memory_space<vmem>>, %arg4: memref<480x128xbf16, #tpu.memory_space<vmem>>, %arg5: memref<8x128xf32, #tpu.memory_space<vmem>>, %arg6: memref<8x128xbf16, #tpu.memory_space<vmem>>) attributes {dimension_semantics = [#tpu.dimension_semantics<parallel>], iteration_bounds = array<i64: 1>, scalar_prefetch = 0 : i64, scratch_operands = 0 : i64, tpu.core_type = #tpu.core_type<tc>, window_params = [{transform_indices = @transform_0, window_bounds = array<i64: 8, 32>}, {transform_indices = @transform_1, window_bounds = array<i64: 8, 32>}, {transform_indices = @transform_2, window_bounds = array<i64: 8, 32>}, {pipeline_mode = #tpu.pipeline_mode<synchronous>, transform_indices = @transform_3, window_bounds = array<i64: 480, 128>}, {pipeline_mode = #tpu.pipeline_mode<synchronous>, transform_indices = @transform_4, window_bounds = array<i64: 8, 128>}, {transform_indices = @transform_5, window_bounds = array<i64: 8, 128>}]} {
    %c0 = arith.constant 0 : index
    %c0_0 = arith.constant 0 : index
    %0 = vector.load %arg5[%c0, %c0_0] : memref<8x128xf32, #tpu.memory_space<vmem>>, vector<8x128xf32>
    %c0_1 = arith.constant 0 : index
    %c0_2 = arith.constant 0 : index
    %1 = vector.load %arg1[%c0_1, %c0_2] : memref<8x32xf32, #tpu.memory_space<vmem>>, vector<8x32xf32>
    %2 = arith.truncf %1 : vector<8x32xf32> to vector<8x32xbf16>
    %c0_3 = arith.constant 0 : index
    %c0_4 = arith.constant 0 : index
    %3 = vector.load %arg4[%c0_3, %c0_4] : memref<480x128xbf16, #tpu.memory_space<vmem>>, vector<32x128xbf16>
    %cst = arith.constant dense<0.000000e+00> : vector<8x128xf32>
    %4 = tpu.matmul %2, %3, %cst {dimension_numbers = #tpu.dot_dimension_numbers<[1], [0], [0], [1], [0, 0, 1, 1], [], []>} : vector<8x32xbf16>, vector<32x128xbf16>, vector<8x128xf32> -> vector<8x128xf32>
    %c0_5 = arith.constant 0 : index
    %c0_6 = arith.constant 0 : index
    %5 = vector.load %arg2[%c0_5, %c0_6] : memref<8x32xf32, #tpu.memory_space<vmem>>, vector<8x32xf32>
    %6 = arith.truncf %5 : vector<8x32xf32> to vector<8x32xbf16>
    %c32 = arith.constant 32 : index
    %c0_7 = arith.constant 0 : index
    %7 = vector.load %arg4[%c32, %c0_7] : memref<480x128xbf16, #tpu.memory_space<vmem>>, vector<32x128xbf16>
    %cst_8 = arith.constant dense<0.000000e+00> : vector<8x128xf32>
    %8 = tpu.matmul %6, %7, %cst_8 {dimension_numbers = #tpu.dot_dimension_numbers<[1], [0], [0], [1], [0, 0, 1, 1], [], []>} : vector<8x32xbf16>, vector<32x128xbf16>, vector<8x128xf32> -> vector<8x128xf32>
    %9 = arith.addf %4, %8 : vector<8x128xf32>
    %c0_9 = arith.constant 0 : index
    %c0_10 = arith.constant 0 : index
    %10 = vector.load %arg3[%c0_9, %c0_10] : memref<8x32xf32, #tpu.memory_space<vmem>>, vector<8x32xf32>
    %11 = arith.truncf %10 : vector<8x32xf32> to vector<8x32xbf16>
    %c64 = arith.constant 64 : index
    %c0_11 = arith.constant 0 : index
    %12 = vector.load %arg4[%c64, %c0_11] : memref<480x128xbf16, #tpu.memory_space<vmem>>, vector<32x128xbf16>
    %cst_12 = arith.constant dense<0.000000e+00> : vector<8x128xf32>
    %13 = tpu.matmul %11, %12, %cst_12 {dimension_numbers = #tpu.dot_dimension_numbers<[1], [0], [0], [1], [0, 0, 1, 1], [], []>} : vector<8x32xbf16>, vector<32x128xbf16>, vector<8x128xf32> -> vector<8x128xf32>
    %14 = arith.addf %9, %13 : vector<8x128xf32>
    %15 = vector.extract_strided_slice %0 {offsets = [0, 0], sizes = [1, 128], strides = [1, 1]} : vector<8x128xf32> to vector<1x128xf32>
    %16 = vector.broadcast %15 : vector<1x128xf32> to vector<8x128xf32>
    %17 = arith.addf %14, %16 : vector<8x128xf32>
    %cst_13 = arith.constant 0.000000e+00 : f32
    %18 = vector.broadcast %cst_13 : f32 to vector<8x128xf32>
    %19 = arith.maximumf %17, %18 : vector<8x128xf32>
    %20 = arith.truncf %19 : vector<8x128xf32> to vector<8x128xbf16>
    %c96 = arith.constant 96 : index
    %c0_14 = arith.constant 0 : index
    %21 = vector.load %arg4[%c96, %c0_14] : memref<480x128xbf16, #tpu.memory_space<vmem>>, vector<128x128xbf16>
    %cst_15 = arith.constant dense<0.000000e+00> : vector<8x128xf32>
    %22 = tpu.matmul %20, %21, %cst_15 {dimension_numbers = #tpu.dot_dimension_numbers<[1], [0], [0], [1], [0, 0, 1, 1], [], []>} : vector<8x128xbf16>, vector<128x128xbf16>, vector<8x128xf32> -> vector<8x128xf32>
    %23 = vector.extract_strided_slice %0 {offsets = [1, 0], sizes = [1, 128], strides = [1, 1]} : vector<8x128xf32> to vector<1x128xf32>
    %24 = vector.broadcast %23 : vector<1x128xf32> to vector<8x128xf32>
    %25 = arith.addf %22, %24 : vector<8x128xf32>
    %26 = arith.truncf %25 : vector<8x128xf32> to vector<8x128xbf16>
    %c224 = arith.constant 224 : index
    %c0_16 = arith.constant 0 : index
    %27 = vector.load %arg4[%c224, %c0_16] : memref<480x128xbf16, #tpu.memory_space<vmem>>, vector<128x128xbf16>
    %cst_17 = arith.constant dense<0.000000e+00> : vector<8x128xf32>
    %28 = tpu.matmul %26, %27, %cst_17 {dimension_numbers = #tpu.dot_dimension_numbers<[1], [0], [0], [1], [0, 0, 1, 1], [], []>} : vector<8x128xbf16>, vector<128x128xbf16>, vector<8x128xf32> -> vector<8x128xf32>
    %29 = vector.extract_strided_slice %0 {offsets = [2, 0], sizes = [1, 128], strides = [1, 1]} : vector<8x128xf32> to vector<1x128xf32>
    %30 = vector.broadcast %29 : vector<1x128xf32> to vector<8x128xf32>
    %31 = arith.addf %28, %30 : vector<8x128xf32>
    %cst_18 = arith.constant 0.000000e+00 : f32
    %32 = vector.broadcast %cst_18 : f32 to vector<8x128xf32>
    %33 = arith.maximumf %31, %32 : vector<8x128xf32>
    %34 = arith.truncf %33 : vector<8x128xf32> to vector<8x128xbf16>
    %c352 = arith.constant 352 : index
    %c0_19 = arith.constant 0 : index
    %35 = vector.load %arg4[%c352, %c0_19] : memref<480x128xbf16, #tpu.memory_space<vmem>>, vector<128x128xbf16>
    %cst_20 = arith.constant dense<0.000000e+00> : vector<8x128xf32>
    %36 = tpu.matmul %34, %35, %cst_20 {dimension_numbers = #tpu.dot_dimension_numbers<[1], [0], [0], [1], [0, 0, 1, 1], [], []>} : vector<8x128xbf16>, vector<128x128xbf16>, vector<8x128xf32> -> vector<8x128xf32>
    %37 = vector.extract_strided_slice %0 {offsets = [3, 0], sizes = [1, 128], strides = [1, 1]} : vector<8x128xf32> to vector<1x128xf32>
    %38 = vector.broadcast %37 : vector<1x128xf32> to vector<8x128xf32>
    %39 = arith.addf %36, %38 : vector<8x128xf32>
    %40 = arith.negf %39 : vector<8x128xf32>
    %41 = math.exp %40 : vector<8x128xf32>
    %cst_21 = arith.constant 1.000000e+00 : f32
    %42 = vector.broadcast %cst_21 : f32 to vector<8x128xf32>
    %43 = arith.addf %42, %41 : vector<8x128xf32>
    %44 = arith.divf %42, %43 : vector<8x128xf32>
    %45 = arith.truncf %44 : vector<8x128xf32> to vector<8x128xbf16>
    %c0_22 = arith.constant 0 : index
    %c0_23 = arith.constant 0 : index
    %46 = vector.load %arg6[%c0_22, %c0_23] : memref<8x128xbf16, #tpu.memory_space<vmem>>, vector<8x128xbf16>
    tpu.vector_store %arg6[%c0_22, %c0_23], %45 {strides = array<i32>} : memref<8x128xbf16, #tpu.memory_space<vmem>>, vector<8x128xbf16>,
    return
  }
  func.func @transform_0(%arg0: i32) -> (i32, i32) {
    %c0_i32 = arith.constant 0 : i32
    %c0_i32_0 = arith.constant 0 : i32
    return %arg0, %c0_i32 : i32, i32
  }
  func.func @transform_1(%arg0: i32) -> (i32, i32) {
    %c0_i32 = arith.constant 0 : i32
    %c0_i32_0 = arith.constant 0 : i32
    return %arg0, %c0_i32 : i32, i32
  }
  func.func @transform_2(%arg0: i32) -> (i32, i32) {
    %c0_i32 = arith.constant 0 : i32
    %c0_i32_0 = arith.constant 0 : i32
    return %arg0, %c0_i32 : i32, i32
  }
  func.func @transform_3(%arg0: i32) -> (i32, i32) {
    %c0_i32 = arith.constant 0 : i32
    %c0_i32_0 = arith.constant 0 : i32
    %c0_i32_1 = arith.constant 0 : i32
    return %c0_i32, %c0_i32_0 : i32, i32
  }
  func.func @transform_4(%arg0: i32) -> (i32, i32) {
    %c0_i32 = arith.constant 0 : i32
    %c0_i32_0 = arith.constant 0 : i32
    %c0_i32_1 = arith.constant 0 : i32
    return %c0_i32, %c0_i32_0 : i32, i32
  }
  func.func @transform_5(%arg0: i32) -> (i32, i32) {
    %c0_i32 = arith.constant 0 : i32
    %c0_i32_0 = arith.constant 0 : i32
    return %arg0, %c0_i32 : i32, i32
  }
}

</mosaic_0001>

<llo_original>
// kernel: ethical_safety_forward.1
$region0: #{ethical_safety_forward.1}
  #allocation0 [shape = 'u32[]', space=smem, size = 0x4, offset = 0x4, fixed_abs, tag = 'smem constant byte address 0x4 - core index']
  #allocation1 [shape = 'u32[144,128]{1,0:T(1,128)}', space=vmem, size = 0x12000, scoped, tag = 'internal scratch']
  %s0 = inlined_call_operand.hbm [shape: f32[8,32], index: 0, kind: input, shape index: {}]
  %s1 = inlined_call_operand.vmem [shape: f32[8,32], index: 1, kind: input, shape index: {}]
  %s2 = inlined_call_operand.hbm [shape: f32[8,32], index: 2, kind: input, shape index: {}]
  %s3 = inlined_call_operand.hbm [shape: bf16[480,128], index: 3, kind: input, shape index: {}]
  %s4 = inlined_call_operand.hbm [shape: f32[8,128], index: 4, kind: input, shape index: {}]
  %s5 = inlined_call_operand.vmem [shape: bf16[8,128], index: 5, kind: output, shape index: {}]
  %s6 = sld [smem:[#allocation0]]
  $region46: #{ethical_safety_forward.1} parent=0
    _
  %s8 = ssub.s32 1, %s6
  %s9 = scalar_select 0, %s8, %s6
  $region1: #{ethical_safety_forward.1} parent=0
    #allocation2 [shape = 'u8[4096]{0}', space=vmem, size = 0x1000, scoped, tag = 'input window, operand 0, single buffered']
    #allocation3 [shape = 's32[1]{0}', space=sflag, size = 0x4, scoped, tag = 'scoped memory for ethical_safety_forward.1']
    #allocation4 [shape = 'u8[4096]{0}', space=vmem, size = 0x1000, scoped, tag = 'input window, operand 2, single buffered']
    #allocation5 [shape = 's32[1]{0}', space=sflag, size = 0x4, scoped, tag = 'scoped memory for ethical_safety_forward.1']
    #allocation6 [shape = 'u8[122880]{0}', space=vmem, size = 0x1e000, scoped, tag = 'input window, operand 3, single buffered']
    #allocation7 [shape = 'u8[4096]{0}', space=vmem, size = 0x1000, scoped, tag = 'input window, operand 4, single buffered']
    #allocation8 [shape = 's32[1]{0}', space=sflag, size = 0x4, scoped, tag = 'scoped memory for ethical_safety_forward.1']
    %10 = vsyncpa [#allocation3], 0
    %11 = vsyncpa [#allocation5], 0
    %12 = vsyncpa [#allocation8], 0
    // Predicated region
    $region2: #{ethical_safety_forward.1} parent=1 // pred_check
      _
    $region3: #{ethical_safety_forward.1} parent=1 // pred_check_branch
      %14 = sbr.rel (0) target = $region5
    $region4: #{ethical_safety_forward.1} parent=1 // pred_region
      %s16 = ssub.s32 128, 128
      %17 = vsyncadd [#allocation3], %s16
      %s19 = sshll.u32 [#allocation2], 4
      %s20 = int_to_ptr.vmem [resolvable:$true] %s19
      %22 = dma.hbm_to_vmem [thread:$0]  %s0, 128, %s20, [#allocation3]
    $region5: #{ethical_safety_forward.1} parent=1 // pred_fallthru
      _
    // Predicated region
    $region6: #{ethical_safety_forward.1} parent=1 // pred_check
      _
    $region7: #{ethical_safety_forward.1} parent=1 // pred_check_branch
      %24 = sbr.rel (0) target = $region9
    $region8: #{ethical_safety_forward.1} parent=1 // pred_region
      _
    $region9: #{ethical_safety_forward.1} parent=1 // pred_fallthru
      _
    // Predicated region
    $region10: #{ethical_safety_forward.1} parent=1 // pred_check
      _
    $region11: #{ethical_safety_forward.1} parent=1 // pred_check_branch
      %26 = sbr.rel (0) target = $region13
    $region12: #{ethical_safety_forward.1} parent=1 // pred_region
      %s28 = ssub.s32 128, 128
      %29 = vsyncadd [#allocation5], %s28
      %s31 = sshll.u32 [#allocation4], 4
      %s32 = int_to_ptr.vmem [resolvable:$true] %s31
      %34 = dma.hbm_to_vmem [thread:$0]  %s2, 128, %s32, [#allocation5]
    $region13: #{ethical_safety_forward.1} parent=1 // pred_fallthru
      _
    // Predicated region
    $region14: #{ethical_safety_forward.1} parent=1 // pred_check
      _
    $region15: #{ethical_safety_forward.1} parent=1 // pred_check_branch
      %36 = sbr.rel (0) target = $region17
    $region16: #{ethical_safety_forward.1} parent=1 // pred_region
      %s38 = ssub.s32 3840, 3840
      %39 = vsyncadd [#allocation5], %s38
      %s40 = sshll.u32 [#allocation6], 4
      %s41 = int_to_ptr.vmem [resolvable:$true] %s40
      %46 = dma.hbm_to_vmem [thread:$0]  %s3, 3840, %s41, [#allocation5], 64, 64, 4
    $region17: #{ethical_safety_forward.1} parent=1 // pred_fallthru
      _
    // Predicated region
    $region18: #{ethical_safety_forward.1} parent=1 // pred_check
      _
    $region19: #{ethical_safety_forward.1} parent=1 // pred_check_branch
      %48 = sbr.rel (0) target = $region21
    $region20: #{ethical_safety_forward.1} parent=1 // pred_region
      %s50 = ssub.s32 128, 128
      %51 = vsyncadd [#allocation8], %s50
      %s53 = sshll.u32 [#allocation7], 4
      %s54 = int_to_ptr.vmem [resolvable:$true] %s53
      %56 = dma.hbm_to_vmem [thread:$0]  %s4, 128, %s54, [#allocation8]
    $region21: #{ethical_safety_forward.1} parent=1 // pred_fallthru
      _
    // Predicated region
    $region22: #{ethical_safety_forward.1} parent=1 // pred_check
      _
    $region23: #{ethical_safety_forward.1} parent=1 // pred_check_branch
      %58 = sbr.rel (0) target = $region25
    $region24: #{ethical_safety_forward.1} parent=1 // pred_region
      %59 = dma.done [#allocation3], 128
    $region25: #{ethical_safety_forward.1} parent=1 // pred_fallthru
      _
    // Predicated region
    $region26: #{ethical_safety_forward.1} parent=1 // pred_check
      _
    $region27: #{ethical_safety_forward.1} parent=1 // pred_check_branch
      %61 = sbr.rel (0) target = $region29
    $region28: #{ethical_safety_forward.1} parent=1 // pred_region
      %62 = dma.done [#allocation5], 128
    $region29: #{ethical_safety_forward.1} parent=1 // pred_fallthru
      _
    // Predicated region
    $region30: #{ethical_safety_forward.1} parent=1 // pred_check
      _
    $region31: #{ethical_safety_forward.1} parent=1 // pred_check_branch
      %64 = sbr.rel (0) target = $region33
    $region32: #{ethical_safety_forward.1} parent=1 // pred_region
      %65 = dma.done [#allocation5], 3840
    $region33: #{ethical_safety_forward.1} parent=1 // pred_fallthru
      _
    // Predicated region
    $region34: #{ethical_safety_forward.1} parent=1 // pred_check
      _
    $region35: #{ethical_safety_forward.1} parent=1 // pred_check_branch
      %67 = sbr.rel (0) target = $region37
    $region36: #{ethical_safety_forward.1} parent=1 // pred_region
      %68 = dma.done [#allocation8], 128
    $region37: #{ethical_safety_forward.1} parent=1 // pred_fallthru
      _
    %v70 = vld [vmem:[#allocation7] sm:$0xff]
    %v71 = vld [vmem:[#allocation2] sm:$0xff]
    %v72 = vpack.c.bf16 %v71, %v71
    %v73 = vld [vmem:[#allocation6] sm:$0xf]
    %v74 = vld [vmem:[#allocation6 + $0x4] sm:$0xf]
    %v75 = vld [vmem:[#allocation6 + $0x8] sm:$0xf]
    %v76 = vld [vmem:[#allocation6 + $0xc] sm:$0xf]
    %v77 = vld [vmem:[%s1] sm:$0xff]
    %v78 = vpack.c.bf16 %v77, %v77
    %v79 = vld [vmem:[#allocation6 + $0x10] sm:$0xf]
    %v80 = vld [vmem:[#allocation6 + $0x14] sm:$0xf]
    %v81 = vld [vmem:[#allocation6 + $0x18] sm:$0xf]
    %v82 = vld [vmem:[#allocation6 + $0x1c] sm:$0xf]
    %v87 = vunpack.c.l.b16 %v79
    %v88 = vunpack.c.l.b16 %v80
    %v89 = vunpack.c.l.b16 %v81
    %v90 = vunpack.c.l.b16 %v82
    %v91 = vpack.c.b16 %v88, %v87
    %v92 = vpack.c.b16 %v90, %v89
    %vm95 = vcmask 261120
    %v97 = vsel %vm95, %v78, 0
    %99 = vmatprep.subr.bf16.mxu0 0
    %100 = vmatpush1.bf16.msra.mxu0 %v91
    %101 = vmatprep.subr.bf16.mxu0 0
    %102 = vmatpush1.bf16.msra.mxu0 %v92
    %103 = vmatprep.subr.bf16.mxu0 0
    %104 = vmatpush1.bf16.msra.mxu0 0
    %105 = vmatprep.subr.bf16.mxu0 0
    %106 = vmatpush1.bf16.msra.mxu0 0
    %107 = vmatprep.subr.bf16.mxu0 0
    %108 = vmatpush1.bf16.msra.mxu0 0
    %109 = vmatprep.subr.bf16.mxu0 0
    %110 = vmatpush1.bf16.msra.mxu0 0
    %111 = vmatprep.subr.bf16.mxu0 0
    %112 = vmatpush1.bf16.msra.mxu0 0
    %113 = vmatprep.subr.bf16.mxu0 0
    %114 = vmatpush1.bf16.msra.mxu0 0
    %115 = vmatprep.subr.bf16.mxu0 0
    %116 = vmatpush1.bf16.msra.mxu0 0
    %117 = vmatprep.subr.bf16.mxu0 0
    %118 = vmatpush1.bf16.msra.mxu0 0
    %119 = vmatprep.subr.bf16.mxu0 0
    %120 = vmatpush1.bf16.msra.mxu0 0
    %121 = vmatprep.subr.bf16.mxu0 0
    %122 = vmatpush1.bf16.msra.mxu0 0
    %123 = vmatprep.subr.bf16.mxu0 0
    %124 = vmatpush1.bf16.msra.mxu0 0
    %125 = vmatprep.subr.bf16.mxu0 0
    %126 = vmatpush1.bf16.msra.mxu0 0
    %127 = vmatprep.subr.bf16.mxu0 0
    %128 = vmatpush1.bf16.msra.mxu0 0
    %129 = vmatprep.subr.bf16.mxu0 0
    %130 = vmatpush1.bf16.msra.mxu0 0
    %131 = vmatprep.mubr.bf16.mxu0 0
    %132 = vmatmul.mubr.bf16.gmra.mrb[0].mxu0 %v97
    %v133 = vpop.f32.mrb[0].mxu0
    %v134 = vadd.f32 0.0, %v133
    %v135 = vpop.f32.mrb[0].mxu0
    %v136 = vpop.f32.mrb[0].mxu0
    %v137 = vpop.f32.mrb[0].mxu0
    %138 = vdwg.mxu0
    %v143 = vunpack.c.l.b16 %v73
    %v144 = vunpack.c.l.b16 %v74
    %v145 = vunpack.c.l.b16 %v75
    %v146 = vunpack.c.l.b16 %v76
    %v147 = vpack.c.b16 %v144, %v143
    %v148 = vpack.c.b16 %v146, %v145
    %v152 = vsel %vm95, %v72, 0
    %154 = vmatprep.subr.bf16.mxu0 0
    %155 = vmatpush1.bf16.msra.mxu0 %v147
    %156 = vmatprep.subr.bf16.mxu0 0
    %157 = vmatpush1.bf16.msra.mxu0 %v148
    %158 = vmatprep.subr.bf16.mxu0 0
    %159 = vmatpush1.bf16.msra.mxu0 0
    %160 = vmatprep.subr.bf16.mxu0 0
    %161 = vmatpush1.bf16.msra.mxu0 0
    %162 = vmatprep.subr.bf16.mxu0 0
    %163 = vmatpush1.bf16.msra.mxu0 0
    %164 = vmatprep.subr.bf16.mxu0 0
    %165 = vmatpush1.bf16.msra.mxu0 0
    %166 = vmatprep.subr.bf16.mxu0 0
    %167 = vmatpush1.bf16.msra.mxu0 0
    %168 = vmatprep.subr.bf16.mxu0 0
    %169 = vmatpush1.bf16.msra.mxu0 0
    %170 = vmatprep.subr.bf16.mxu0 0
    %171 = vmatpush1.bf16.msra.mxu0 0
    %172 = vmatprep.subr.bf16.mxu0 0
    %173 = vmatpush1.bf16.msra.mxu0 0
    %174 = vmatprep.subr.bf16.mxu0 0
    %175 = vmatpush1.bf16.msra.mxu0 0
    %176 = vmatprep.subr.bf16.mxu0 0
    %177 = vmatpush1.bf16.msra.mxu0 0
    %178 = vmatprep.subr.bf16.mxu0 0
    %179 = vmatpush1.bf16.msra.mxu0 0
    %180 = vmatprep.subr.bf16.mxu0 0
    %181 = vmatpush1.bf16.msra.mxu0 0
    %182 = vmatprep.subr.bf16.mxu0 0
    %183 = vmatpush1.bf16.msra.mxu0 0
    %184 = vmatprep.subr.bf16.mxu0 0
    %185 = vmatpush1.bf16.msra.mxu0 0
    %186 = vmatprep.mubr.bf16.mxu0 0
    %187 = vmatmul.mubr.bf16.gmra.mrb[0].mxu0 %v152
    %v188 = vpop.f32.mrb[0].mxu0
    %v189 = vadd.f32 %v134, %v188
    %v190 = vpop.f32.mrb[0].mxu0
    %v191 = vpop.f32.mrb[0].mxu0
    %v192 = vpop.f32.mrb[0].mxu0
    %193 = vdwg.mxu0
    %v194 = vld [vmem:[#allocation4] sm:$0xff]
    %v195 = vpack.c.bf16 %v194, %v194
    %v196 = vld [vmem:[#allocation6 + $0x20] sm:$0xf]
    %v197 = vld [vmem:[#allocation6 + $0x24] sm:$0xf]
    %v198 = vld [vmem:[#allocation6 + $0x28] sm:$0xf]
    %v199 = vld [vmem:[#allocation6 + $0x2c] sm:$0xf]
    %v204 = vunpack.c.l.b16 %v196
    %v205 = vunpack.c.l.b16 %v197
    %v206 = vunpack.c.l.b16 %v198
    %v207 = vunpack.c.l.b16 %v199
    %v208 = vpack.c.b16 %v205, %v204
    %v209 = vpack.c.b16 %v207, %v206
    %v213 = vsel %vm95, %v195, 0
    %215 = vmatprep.subr.bf16.mxu0 0
    %216 = vmatpush1.bf16.msra.mxu0 %v208
    %217 = vmatprep.subr.bf16.mxu0 0
    %218 = vmatpush1.bf16.msra.mxu0 %v209
    %219 = vmatprep.subr.bf16.mxu0 0
    %220 = vmatpush1.bf16.msra.mxu0 0
    %221 = vmatprep.subr.bf16.mxu0 0
    %222 = vmatpush1.bf16.msra.mxu0 0
    %223 = vmatprep.subr.bf16.mxu0 0
    %224 = vmatpush1.bf16.msra.mxu0 0
    %225 = vmatprep.subr.bf16.mxu0 0
    %226 = vmatpush1.bf16.msra.mxu0 0
    %227 = vmatprep.subr.bf16.mxu0 0
    %228 = vmatpush1.bf16.msra.mxu0 0
    %229 = vmatprep.subr.bf16.mxu0 0
    %230 = vmatpush1.bf16.msra.mxu0 0
    %231 = vmatprep.subr.bf16.mxu0 0
    %232 = vmatpush1.bf16.msra.mxu0 0
    %233 = vmatprep.subr.bf16.mxu0 0
    %234 = vmatpush1.bf16.msra.mxu0 0
    %235 = vmatprep.subr.bf16.mxu0 0
    %236 = vmatpush1.bf16.msra.mxu0 0
    %237 = vmatprep.subr.bf16.mxu0 0
    %238 = vmatpush1.bf16.msra.mxu0 0
    %239 = vmatprep.subr.bf16.mxu0 0
    %240 = vmatpush1.bf16.msra.mxu0 0
    %241 = vmatprep.subr.bf16.mxu0 0
    %242 = vmatpush1.bf16.msra.mxu0 0
    %243 = vmatprep.subr.bf16.mxu0 0
    %244 = vmatpush1.bf16.msra.mxu0 0
    %245 = vmatprep.subr.bf16.mxu0 0
    %246 = vmatpush1.bf16.msra.mxu0 0
    %247 = vmatprep.mubr.bf16.mxu0 0
    %248 = vmatmul.mubr.bf16.gmra.mrb[0].mxu0 %v213
    %v249 = vpop.f32.mrb[0].mxu0
    %v250 = vadd.f32 0.0, %v249
    %v251 = vpop.f32.mrb[0].mxu0
    %v252 = vpop.f32.mrb[0].mxu0
    %v253 = vpop.f32.mrb[0].mxu0
    %254 = vdwg.mxu0
    %v255 = vadd.f32 %v189, %v250
    %v256 = vlaneseq
    %v257 = vshrl.u32 %v256, 7
    %v258 = vsub.s32 0, %v257
    %v259 = vrot.slane %v70, %v258
    %v260 = vadd.f32 %v255, %v259
    %v261 = vmax.f32 %v260, 0.0
    %v262 = vpack.c.bf16 %v261, %v261
    %v263 = vld [vmem:[#allocation6 + $0x30] sm:$0xf]
    %v264 = vld [vmem:[#allocation6 + $0x34] sm:$0xf]
    %v265 = vld [vmem:[#allocation6 + $0x38] sm:$0xf]
    %v266 = vld [vmem:[#allocation6 + $0x3c] sm:$0xf]
    %v267 = vld [vmem:[#allocation6 + $0x40] sm:$0xf]
    %v268 = vld [vmem:[#allocation6 + $0x44] sm:$0xf]
    %v269 = vld [vmem:[#allocation6 + $0x48] sm:$0xf]
    %v270 = vld [vmem:[#allocation6 + $0x4c] sm:$0xf]
    %v271 = vld [vmem:[#allocation6 + $0x50] sm:$0xf]
    %v272 = vld [vmem:[#allocation6 + $0x54] sm:$0xf]
    %v273 = vld [vmem:[#allocation6 + $0x58] sm:$0xf]
    %v274 = vld [vmem:[#allocation6 + $0x5c] sm:$0xf]
    %v275 = vld [vmem:[#allocation6 + $0x60] sm:$0xf]
    %v276 = vld [vmem:[#allocation6 + $0x64] sm:$0xf]
    %v277 = vld [vmem:[#allocation6 + $0x68] sm:$0xf]
    %v278 = vld [vmem:[#allocation6 + $0x6c] sm:$0xf]
    %v279 = vlaneseq
    %v280 = vshrl.u32 %v279, 7
    %v281 = vsub.s32 1, %v280
    %v282 = vrot.slane %v70, %v281
    %v299 = vunpack.c.l.b16 %v263
    %v300 = vunpack.c.l.b16 %v264
    %v301 = vunpack.c.l.b16 %v265
    %v302 = vunpack.c.l.b16 %v266
    %v303 = vunpack.c.l.b16 %v267
    %v304 = vunpack.c.l.b16 %v268
    %v305 = vunpack.c.l.b16 %v269
    %v306 = vunpack.c.l.b16 %v270
    %v307 = vunpack.c.l.b16 %v271
    %v308 = vunpack.c.l.b16 %v272
    %v309 = vunpack.c.l.b16 %v273
    %v310 = vunpack.c.l.b16 %v274
    %v311 = vunpack.c.l.b16 %v275
    %v312 = vunpack.c.l.b16 %v276
    %v313 = vunpack.c.l.b16 %v277
    %v314 = vunpack.c.l.b16 %v278
    %v315 = vpack.c.b16 %v300, %v299
    %v316 = vpack.c.b16 %v302, %v301
    %v317 = vpack.c.b16 %v304, %v303
    %v318 = vpack.c.b16 %v306, %v305
    %v319 = vpack.c.b16 %v308, %v307
    %v320 = vpack.c.b16 %v310, %v309
    %v321 = vpack.c.b16 %v312, %v311
    %v322 = vpack.c.b16 %v314, %v313
    %331 = vmatprep.subr.bf16.mxu0 0
    %332 = vmatpush1.bf16.msra.mxu0 %v315
    %333 = vmatprep.subr.bf16.mxu0 0
    %334 = vmatpush1.bf16.msra.mxu0 %v316
    %335 = vmatprep.subr.bf16.mxu0 0
    %336 = vmatpush1.bf16.msra.mxu0 %v317
    %337 = vmatprep.subr.bf16.mxu0 0
    %338 = vmatpush1.bf16.msra.mxu0 %v318
    %339 = vmatprep.subr.bf16.mxu0 0
    %340 = vmatpush1.bf16.msra.mxu0 %v319
    %341 = vmatprep.subr.bf16.mxu0 0
    %342 = vmatpush1.bf16.msra.mxu0 %v320
    %343 = vmatprep.subr.bf16.mxu0 0
    %344 = vmatpush1.bf16.msra.mxu0 %v321
    %345 = vmatprep.subr.bf16.mxu0 0
    %346 = vmatpush1.bf16.msra.mxu0 %v322
    %347 = vmatprep.subr.bf16.mxu0 0
    %348 = vmatpush1.bf16.msra.mxu0 0
    %349 = vmatprep.subr.bf16.mxu0 0
    %350 = vmatpush1.bf16.msra.mxu0 0
    %351 = vmatprep.subr.bf16.mxu0 0
    %352 = vmatpush1.bf16.msra.mxu0 0
    %353 = vmatprep.subr.bf16.mxu0 0
    %354 = vmatpush1.bf16.msra.mxu0 0
    %355 = vmatprep.subr.bf16.mxu0 0
    %356 = vmatpush1.bf16.msra.mxu0 0
    %357 = vmatprep.subr.bf16.mxu0 0
    %358 = vmatpush1.bf16.msra.mxu0 0
    %359 = vmatprep.subr.bf16.mxu0 0
    %360 = vmatpush1.bf16.msra.mxu0 0
    %361 = vmatprep.subr.bf16.mxu0 0
    %362 = vmatpush1.bf16.msra.mxu0 0
    %363 = vmatprep.mubr.bf16.mxu0 0
    %364 = vmatmul.mubr.bf16.gmra.mrb[0].mxu0 %v262
    %v365 = vpop.f32.mrb[0].mxu0
    %v366 = vadd.f32 %v282, %v365
    %v367 = vpop.f32.mrb[0].mxu0
    %v368 = vpop.f32.mrb[0].mxu0
    %v369 = vpop.f32.mrb[0].mxu0
    %370 = vdwg.mxu0
    %v371 = vpack.c.bf16 %v366, %v366
    %v372 = vld [vmem:[#allocation6 + $0x70] sm:$0xf]
    %v373 = vld [vmem:[#allocation6 + $0x74] sm:$0xf]
    %v374 = vld [vmem:[#allocation6 + $0x78] sm:$0xf]
    %v375 = vld [vmem:[#allocation6 + $0x7c] sm:$0xf]
    %v376 = vld [vmem:[#allocation6 + $0x80] sm:$0xf]
    %v377 = vld [vmem:[#allocation6 + $0x84] sm:$0xf]
    %v378 = vld [vmem:[#allocation6 + $0x88] sm:$0xf]
    %v379 = vld [vmem:[#allocation6 + $0x8c] sm:$0xf]
    %v380 = vld [vmem:[#allocation6 + $0x90] sm:$0xf]
    %v381 = vld [vmem:[#allocation6 + $0x94] sm:$0xf]
    %v382 = vld [vmem:[#allocation6 + $0x98] sm:$0xf]
    %v383 = vld [vmem:[#allocation6 + $0x9c] sm:$0xf]
    %v384 = vld [vmem:[#allocation6 + $0xa0] sm:$0xf]
    %v385 = vld [vmem:[#allocation6 + $0xa4] sm:$0xf]
    %v386 = vld [vmem:[#allocation6 + $0xa8] sm:$0xf]
    %v387 = vld [vmem:[#allocation6 + $0xac] sm:$0xf]
    %v388 = vlaneseq
    %v389 = vshrl.u32 %v388, 7
    %v390 = vsub.s32 2, %v389
    %v391 = vrot.slane %v70, %v390
    %v408 = vunpack.c.l.b16 %v372
    %v409 = vunpack.c.l.b16 %v373
    %v410 = vunpack.c.l.b16 %v374
    %v411 = vunpack.c.l.b16 %v375
    %v412 = vunpack.c.l.b16 %v376
    %v413 = vunpack.c.l.b16 %v377
    %v414 = vunpack.c.l.b16 %v378
    %v415 = vunpack.c.l.b16 %v379
    %v416 = vunpack.c.l.b16 %v380
    %v417 = vunpack.c.l.b16 %v381
    %v418 = vunpack.c.l.b16 %v382
    %v419 = vunpack.c.l.b16 %v383
    %v420 = vunpack.c.l.b16 %v384
    %v421 = vunpack.c.l.b16 %v385
    %v422 = vunpack.c.l.b16 %v386
    %v423 = vunpack.c.l.b16 %v387
    %v424 = vpack.c.b16 %v409, %v408
    %v425 = vpack.c.b16 %v411, %v410
    %v426 = vpack.c.b16 %v413, %v412
    %v427 = vpack.c.b16 %v415, %v414
    %v428 = vpack.c.b16 %v417, %v416
    %v429 = vpack.c.b16 %v419, %v418
    %v430 = vpack.c.b16 %v421, %v420
    %v431 = vpack.c.b16 %v423, %v422
    %440 = vmatprep.subr.bf16.mxu0 0
    %441 = vmatpush1.bf16.msra.mxu0 %v424
    %442 = vmatprep.subr.bf16.mxu0 0
    %443 = vmatpush1.bf16.msra.mxu0 %v425
    %444 = vmatprep.subr.bf16.mxu0 0
    %445 = vmatpush1.bf16.msra.mxu0 %v426
    %446 = vmatprep.subr.bf16.mxu0 0
    %447 = vmatpush1.bf16.msra.mxu0 %v427
    %448 = vmatprep.subr.bf16.mxu0 0
    %449 = vmatpush1.bf16.msra.mxu0 %v428
    %450 = vmatprep.subr.bf16.mxu0 0
    %451 = vmatpush1.bf16.msra.mxu0 %v429
    %452 = vmatprep.subr.bf16.mxu0 0
    %453 = vmatpush1.bf16.msra.mxu0 %v430
    %454 = vmatprep.subr.bf16.mxu0 0
    %455 = vmatpush1.bf16.msra.mxu0 %v431
    %456 = vmatprep.subr.bf16.mxu0 0
    %457 = vmatpush1.bf16.msra.mxu0 0
    %458 = vmatprep.subr.bf16.mxu0 0
    %459 = vmatpush1.bf16.msra.mxu0 0
    %460 = vmatprep.subr.bf16.mxu0 0
    %461 = vmatpush1.bf16.msra.mxu0 0
    %462 = vmatprep.subr.bf16.mxu0 0
    %463 = vmatpush1.bf16.msra.mxu0 0
    %464 = vmatprep.subr.bf16.mxu0 0
    %465 = vmatpush1.bf16.msra.mxu0 0
    %466 = vmatprep.subr.bf16.mxu0 0
    %467 = vmatpush1.bf16.msra.mxu0 0
    %468 = vmatprep.subr.bf16.mxu0 0
    %469 = vmatpush1.bf16.msra.mxu0 0
    %470 = vmatprep.subr.bf16.mxu0 0
    %471 = vmatpush1.bf16.msra.mxu0 0
    %472 = vmatprep.mubr.bf16.mxu0 0
    %473 = vmatmul.mubr.bf16.gmra.mrb[0].mxu0 %v371
    %v474 = vpop.f32.mrb[0].mxu0
    %v475 = vadd.f32 %v391, %v474
    %v476 = vpop.f32.mrb[0].mxu0
    %v477 = vpop.f32.mrb[0].mxu0
    %v478 = vpop.f32.mrb[0].mxu0
    %479 = vdwg.mxu0
    %v480 = vmax.f32 %v475, 0.0
    %v481 = vpack.c.bf16 %v480, %v480
    %v482 = vld [vmem:[#allocation6 + $0xb0] sm:$0xf]
    %v483 = vld [vmem:[#allocation6 + $0xb4] sm:$0xf]
    %v484 = vld [vmem:[#allocation6 + $0xb8] sm:$0xf]
    %v485 = vld [vmem:[#allocation6 + $0xbc] sm:$0xf]
    %v486 = vld [vmem:[#allocation6 + $0xc0] sm:$0xf]
    %v487 = vld [vmem:[#allocation6 + $0xc4] sm:$0xf]
    %v488 = vld [vmem:[#allocation6 + $0xc8] sm:$0xf]
    %v489 = vld [vmem:[#allocation6 + $0xcc] sm:$0xf]
    %v490 = vld [vmem:[#allocation6 + $0xd0] sm:$0xf]
    %v491 = vld [vmem:[#allocation6 + $0xd4] sm:$0xf]
    %v492 = vld [vmem:[#allocation6 + $0xd8] sm:$0xf]
    %v493 = vld [vmem:[#allocation6 + $0xdc] sm:$0xf]
    %v494 = vld [vmem:[#allocation6 + $0xe0] sm:$0xf]
    %v495 = vld [vmem:[#allocation6 + $0xe4] sm:$0xf]
    %v496 = vld [vmem:[#allocation6 + $0xe8] sm:$0xf]
    %v497 = vld [vmem:[#allocation6 + $0xec] sm:$0xf]
    %v498 = vlaneseq
    %v499 = vshrl.u32 %v498, 7
    %v500 = vsub.s32 3, %v499
    %v501 = vrot.slane %v70, %v500
    %v518 = vunpack.c.l.b16 %v482
    %v519 = vunpack.c.l.b16 %v483
    %v520 = vunpack.c.l.b16 %v484
    %v521 = vunpack.c.l.b16 %v485
    %v522 = vunpack.c.l.b16 %v486
    %v523 = vunpack.c.l.b16 %v487
    %v524 = vunpack.c.l.b16 %v488
    %v525 = vunpack.c.l.b16 %v489
    %v526 = vunpack.c.l.b16 %v490
    %v527 = vunpack.c.l.b16 %v491
    %v528 = vunpack.c.l.b16 %v492
    %v529 = vunpack.c.l.b16 %v493
    %v530 = vunpack.c.l.b16 %v494
    %v531 = vunpack.c.l.b16 %v495
    %v532 = vunpack.c.l.b16 %v496
    %v533 = vunpack.c.l.b16 %v497
    %v534 = vpack.c.b16 %v519, %v518
    %v535 = vpack.c.b16 %v521, %v520
    %v536 = vpack.c.b16 %v523, %v522
    %v537 = vpack.c.b16 %v525, %v524
    %v538 = vpack.c.b16 %v527, %v526
    %v539 = vpack.c.b16 %v529, %v528
    %v540 = vpack.c.b16 %v531, %v530
    %v541 = vpack.c.b16 %v533, %v532
    %550 = vmatprep.subr.bf16.mxu0 0
    %551 = vmatpush1.bf16.msra.mxu0 %v534
    %552 = vmatprep.subr.bf16.mxu0 0
    %553 = vmatpush1.bf16.msra.mxu0 %v535
    %554 = vmatprep.subr.bf16.mxu0 0
    %555 = vmatpush1.bf16.msra.mxu0 %v536
    %556 = vmatprep.subr.bf16.mxu0 0
    %557 = vmatpush1.bf16.msra.mxu0 %v537
    %558 = vmatprep.subr.bf16.mxu0 0
    %559 = vmatpush1.bf16.msra.mxu0 %v538
    %560 = vmatprep.subr.bf16.mxu0 0
    %561 = vmatpush1.bf16.msra.mxu0 %v539
    %562 = vmatprep.subr.bf16.mxu0 0
    %563 = vmatpush1.bf16.msra.mxu0 %v540
    %564 = vmatprep.subr.bf16.mxu0 0
    %565 = vmatpush1.bf16.msra.mxu0 %v541
    %566 = vmatprep.subr.bf16.mxu0 0
    %567 = vmatpush1.bf16.msra.mxu0 0
    %568 = vmatprep.subr.bf16.mxu0 0
    %569 = vmatpush1.bf16.msra.mxu0 0
    %570 = vmatprep.subr.bf16.mxu0 0
    %571 = vmatpush1.bf16.msra.mxu0 0
    %572 = vmatprep.subr.bf16.mxu0 0
    %573 = vmatpush1.bf16.msra.mxu0 0
    %574 = vmatprep.subr.bf16.mxu0 0
    %575 = vmatpush1.bf16.msra.mxu0 0
    %576 = vmatprep.subr.bf16.mxu0 0
    %577 = vmatpush1.bf16.msra.mxu0 0
    %578 = vmatprep.subr.bf16.mxu0 0
    %579 = vmatpush1.bf16.msra.mxu0 0
    %580 = vmatprep.subr.bf16.mxu0 0
    %581 = vmatpush1.bf16.msra.mxu0 0
    %582 = vmatprep.mubr.bf16.mxu0 0
    %583 = vmatmul.mubr.bf16.gmra.mrb[0].mxu0 %v481
    %v584 = vpop.f32.mrb[0].mxu0
    %v585 = vadd.f32 %v501, %v584
    %v586 = vpop.f32.mrb[0].mxu0
    %v587 = vpop.f32.mrb[0].mxu0
    %v588 = vpop.f32.mrb[0].mxu0
    %589 = vdwg.mxu0
    %v590 = vxor.u32 %v585, 2147483648
    %v591 = vmul.f32 %v590, 1.442695
    %v592 = vpow.pop %v591
    %v593 = vadd.f32 %v592, 1.0
    %v594 = vrcp.pop %v593
    %v595 = vmul.f32 1.0, %v594
    %v596 = vpack.c.bf16 %v595, %v595
    %597 = vst [vmem:[%s5] sm:$0xf] %v596
    // Predicated region
    $region38: #{ethical_safety_forward.1} parent=1 // pred_check
      _
    $region39: #{ethical_safety_forward.1} parent=1 // pred_check_branch
      %599 = sbr.rel (0) target = $region41
    $region40: #{ethical_safety_forward.1} parent=1 // pred_region
      _
    $region41: #{ethical_safety_forward.1} parent=1 // pred_fallthru
      _
    // Predicated region
    $region42: #{ethical_safety_forward.1} parent=1 // pred_check
      _
    $region43: #{ethical_safety_forward.1} parent=1 // pred_check_branch
      %601 = sbr.rel (0) target = $region45
    $region44: #{ethical_safety_forward.1} parent=1 // pred_region
      _
    $region45: #{ethical_safety_forward.1} parent=1 // pred_fallthru
      _
    %602 = vsyncpa [#allocation3], 1
    %603 = vsyncpa [#allocation5], 1
    %604 = vsyncpa [#allocation8], 1

</llo_original>
